<compile_context>
chip_gen: v5e
topology: v5e:2x2
jax: 0.10.0
libtpu: 0.0.40
codegen_flags: <defaults>
</compile_context>

<pallas_src>
import jax
import jax.numpy as jnp
from jax.experimental import pallas as pl
from jax.experimental.pallas import tpu as pltpu


# ----------------------------------------------------------------------------- helpers

def _vmem_config():
    """Generation-aware VMEM limit/budget (review: v7x has 64 MiB physical)."""
    try:
        cap = int(pltpu.get_tpu_info().vmem_capacity_bytes)
    except Exception:
        cap = 64 << 20                      # conservative fallback (v7x per-core VMEM)
    limit = min((cap * 3) // 4, 96 << 20)   # 48 MiB on v7x, 96 MiB on v5e/v6e
    budget = (limit * 2) // 3               # headroom for Mosaic-materialized temporaries
    return limit, budget


def _pick_r_tile(n_rays: int, n_pts: int, vmem_budget: int) -> int:
    """Ray-tile (multiple of 8): big enough blocks, >= ~8 grid steps per core,
    and a VMEM estimate that includes streamed blocks, temporaries and the
    resident constants."""
    # Streamed blocks, double-buffered: dist (P) + depth (P) + color (3P) + out (3), f32.
    stream_row = 2 * (n_pts + n_pts + 3 * n_pts + 3) * 4
    # In-kernel f32 temporaries (tau, splits, csum, T_incl, T_excl, w, w_exp, prod, ...).
    temps_row = (8 * n_pts + 9 * n_pts) * 4
    # Resident bf16 constants (inclusive mask (P,P), expand (P,3P), reduce (3P,3)), x2 buffers.
    const_bytes = 2 * 2 * (n_pts * n_pts + 3 * n_pts * n_pts + 9 * n_pts)
    avail = vmem_budget - const_bytes
    if avail <= vmem_budget // 4:
        # TODO(synk): for n_pts >= ~512 replace the quadratic resident constants with a
        # log2(P) roll-based lane scan + per-channel reduction so they drop out of VMEM.
        avail = vmem_budget // 4
    r_vmem = max(8, avail // (stream_row + temps_row))
    # >= ~8 grid steps per TensorCore (2 cores on v7x) so the pipeline overlaps DMA;
    # at production ray counts (>= ~8k rows) this still yields >= 512-row (>0.7 MiB) blocks.
    r_steps = max(8, n_rays // 16)
    r = min(r_vmem, r_steps, 4096)
    return max(8, (int(r) // 8) * 8)


def _split_matmul(a_f32, b01_bf16, n_terms: int = 3):
    """f32 x {0,1} matmul on the MXU's native bf16 path without precision loss.

    `a` is decomposed into a sum of bf16 terms (bf16*bf16 products are exact and
    the MXU accumulates in f32), so the result matches an exact f32 matmul to
    ~2^-24 regardless of the backend's default matmul precision, while running
    at full bf16 MXU rate."""
    acc = None
    resid = a_f32
    for _ in range(n_terms):
        hi = resid.astype(jnp.bfloat16)
        part = jnp.dot(hi, b01_bf16, preferred_element_type=jnp.float32)
        acc = part if acc is None else acc + part
        resid = resid - hi.astype(jnp.float32)
    return acc


# ----------------------------------------------------------------------------- kernel

def _volume_sdf_color_kernel(s_ref, mask_ref, expand_ref, reduce_ref,
                             dist_ref, depth_ref, color_ref, out_ref):
    """One ray tile: SDF->density, volume-rendering weights, fused color aggregation.

    s_ref      : (1,1) f32 SMEM    -- precomputed clip(exp(10*variance))
    mask_ref   : (P,P)   bf16 VMEM -- inclusive-prefix 0/1 mask (j<=i), resident
    expand_ref : (P,3P)  bf16 VMEM -- 0/1 channel-expansion matrix, resident
    reduce_ref : (3P,3)  bf16 VMEM -- 0/1 channel-reduction matrix, resident
    dist/depth : (r_tile, P)   streamed
    color_ref  : (r_tile, 3P)  streamed (channel-interleaved, contiguous reshape)
    out_ref    : (r_tile, 3)   f32
    """
    f32 = jnp.float32
    s = s_ref[0, 0]
    dist = dist_ref[...].astype(f32)       # in-kernel upcast (inputs may be bf16)
    depth = depth_ref[...].astype(f32)
    colorf = color_ref[...].astype(f32)
    rows = dist.shape[0]

    # --- sdf_to_density_neus, numerically stable (the expression is even in x) ---
    x = jnp.abs(dist * s)
    e = jnp.exp(-x)                                         # EUP
    denom = 1.0 + e
    inv = pl.reciprocal(denom, approx=True)                 # EUP approx rcp
    inv = inv * (2.0 - denom * inv)                         # Newton #1 (VPU)
    inv = inv * (2.0 - denom * inv)                         # Newton #2 (VPU) -> ~f32 exact
    density = (s * e) * (inv * inv)

    # --- deltas: depth[i+1] - depth[i], last sample gets 1e10 ---
    # (exact arithmetic; a pltpu.roll + where variant would stay lane-dense but the
    #  slice/concat form is unambiguous and cheap relative to the streamed bytes)
    diff = depth[:, 1:] - depth[:, :-1]
    deltas = jnp.concatenate([diff, jnp.full((rows, 1), 1e10, f32)], axis=-1)
    tau = deltas * density

    # --- transmittance: inclusive prefix sum on the (idle) MXU, single exp on EUP ---
    csum = _split_matmul(tau, mask_ref[...])                # csum[i] = sum_{j<=i} tau_j
    t_incl = jnp.exp(-csum)                                 # EUP (only exp on this path)
    t_excl = jnp.concatenate([jnp.ones((rows, 1), f32), t_incl[:, :-1]], axis=-1)
    w = t_excl - t_incl                                     # == t_excl * (1 - exp(-tau))

    # --- fused aggregation: out[r,c] = sum_p w[r,p] * color[r,p,c] ---
    w_exp = _split_matmul(w, expand_ref[...])               # (rows, 3P): w replicated per channel
    prod = w_exp * colorf
    out_ref[...] = _split_matmul(prod, reduce_ref[...]).astype(out_ref.dtype)


# ----------------------------------------------------------------------------- wrapper

def _render_color_impl(variance, distance, depth_values, color):
    """distance, depth_values: (n_rays, n_pts); color: (n_rays, n_pts, C).
    Returns the aggregated color (n_rays, C)."""
    n_rays, n_pts = distance.shape
    nc = color.shape[-1]

    # Lane-pad the sample axis to a multiple of 128 (v5e: unmasked vst, MXU fit).
    # Padding is constructed so padded samples contribute exactly zero weight:
    #   dist pad = +1e9  -> density = 0 ;  depth pad = last + 1e10 -> the last *real*
    #   sample keeps its 1e10 terminal delta; pad deltas are multiplied by density=0.
    pad_p = (-n_pts) % 128
    if pad_p:
        distance = jnp.concatenate(
            [distance, jnp.full((n_rays, pad_p), 1e9, distance.dtype)], axis=-1)
        far = depth_values[:, -1:] + jnp.asarray(1e10, depth_values.dtype)
        depth_values = jnp.concatenate(
            [depth_values, jnp.broadcast_to(far, (n_rays, pad_p))], axis=-1)
        color = jnp.concatenate(
            [color, jnp.zeros((n_rays, pad_p, nc), color.dtype)], axis=1)
    p = n_pts + pad_p

    # (R, P, C) -> (R, P*C): contiguous reshape, no HBM copy.  Inputs keep their
    # incoming dtype; the kernel upcasts in-register.
    colorf = color.reshape(n_rays, p * nc)

    vmem_limit, vmem_budget = _vmem_config()
    r_tile = _pick_r_tile(n_rays, p, vmem_budget)

    pad_r = (-n_rays) % r_tile
    if pad_r:
        distance = jnp.pad(distance, ((0, pad_r), (0, 0)))
        depth_values = jnp.pad(depth_values, ((0, pad_r), (0, 0)))
        colorf = jnp.pad(colorf, ((0, pad_r), (0, 0)))
    n_pad = n_rays + pad_r

    # SingleVarianceNetwork + clip, once -> SMEM scalar.
    s2d = jnp.clip(jnp.exp(jnp.asarray(variance, jnp.float32) * 10.0),
                   1e-6, 1e6).reshape(1, 1)

    # Resident 0/1 constants (exact in bf16), DMA'd once (constant block index).
    p_idx = jnp.arange(p)
    k_idx = jnp.arange(p * nc)
    incl_mask = (p_idx[:, None] <= p_idx[None, :]).astype(jnp.bfloat16)           # (P, P)
    expand = (k_idx[None, :] // nc == p_idx[:, None]).astype(jnp.bfloat16)        # (P, P*C)
    reduce_ = (k_idx[:, None] % nc == jnp.arange(nc)[None, :]).astype(jnp.bfloat16)  # (P*C, C)

    out = pl.pallas_call(
        _volume_sdf_color_kernel,
        out_shape=jax.ShapeDtypeStruct((n_pad, nc), jnp.float32),
        grid=(n_pad // r_tile,),
        in_specs=[
            pl.BlockSpec(memory_space=pltpu.MemorySpace.SMEM),          # s (1,1)
            pl.BlockSpec((p, p), lambda i: (0, 0)),                     # inclusive mask
            pl.BlockSpec((p, p * nc), lambda i: (0, 0)),                # channel expand
            pl.BlockSpec((p * nc, nc), lambda i: (0, 0)),               # channel reduce
            pl.BlockSpec((r_tile, p), lambda i: (i, 0)),                # distance
            pl.BlockSpec((r_tile, p), lambda i: (i, 0)),                # depth
            pl.BlockSpec((r_tile, p * nc), lambda i: (i, 0)),           # color (interleaved)
        ],
        out_specs=pl.BlockSpec((r_tile, nc), lambda i: (i, 0)),
        compiler_params=pltpu.CompilerParams(
            dimension_semantics=("parallel",),
            vmem_limit_bytes=vmem_limit,
        ),
    )(s2d, incl_mask, expand, reduce_, distance, depth_values, colorf)

    if pad_r:
        out = out[:n_rays]
    return out


_render_color = jax.jit(_render_color_impl)


def volume_sdf_render(variance, distance, depth_values, color, return_geometry=True):
    """VolumeSDFRenderer.forward given the implicit-network outputs.

    The `sampler` / `implicit_fn.get_distance_color` networks are external; their
    outputs are the inputs here.  Returns {'color': (n_rays, C), 'geometry': zeros}.
    The all-zeros geometry is built *outside* the jitted hot path (and can be
    skipped entirely with return_geometry=False) so it adds no HBM traffic to the
    render program."""
    out_color = _render_color(variance, distance, depth_values, color)
    n_rays, n_pts = distance.shape
    out = {"color": out_color}
    if return_geometry:
        out["geometry"] = jnp.zeros((n_rays * n_pts, color.shape[-1]), color.dtype)
    else:
        out["geometry"] = None
    return out


# ----------------------------------------------------------------------------- reference

def _reference(variance, distance, depth, color):
    """Pure-JAX mirror of the PyTorch math for validation."""
    s = jnp.clip(jnp.exp(variance * 10.0), 1e-6, 1e6)
    x = jnp.abs(distance * s)                      # e^-x/(1+e^-x)^2 is even in x (stable form)
    e = jnp.exp(-x)
    density = s * e / (1.0 + e) ** 2
    deltas = jnp.concatenate(
        [depth[:, 1:] - depth[:, :-1], jnp.full_like(depth[:, :1], 1e10)], axis=-1)
    tau = deltas * density
    n = depth.shape[0]
    t_excl = jnp.concatenate(
        [jnp.ones((n, 1), jnp.float32),
         jnp.exp(-jnp.cumsum(tau[:, :-1], axis=-1))], axis=-1)
    w = t_excl * (1.0 - jnp.exp(-tau))
    return jnp.sum(w[..., None] * color, axis=1)


if __name__ == "__main__":
    key = jax.random.PRNGKey(0)
    n_rays, n_pts = 256, 128
    k1, k2, k3 = jax.random.split(key, 3)

    # Synthetic stand-ins for the sampler / implicit_fn outputs.
    distance = jax.random.normal(k1, (n_rays, n_pts), jnp.float32) * 0.5      # SDF values
    step = jax.random.uniform(k2, (n_rays, n_pts), jnp.float32, minval=0.01, maxval=0.1)
    depth = 1.0 + jnp.cumsum(step, axis=-1)                                   # sample_lengths[...,0]
    color = jax.random.uniform(k3, (n_rays, n_pts, 3), jnp.float32)
    variance = jnp.float32(0.3)                                               # SingleVarianceNetwork init

    out = jax.block_until_ready(volume_sdf_render(variance, distance, depth, color))

    ref_color = _reference(variance, distance, depth, color)
    assert out["color"].shape == (n_rays, 3)
    assert out["geometry"].shape == (n_rays * n_pts, 3)
    assert jnp.allclose(out["color"], ref_color, rtol=5e-4, atol=5e-4), "color mismatch"
    print("KERNEL_OK")
</pallas_src>

<mosaic_0001>
module attributes {stable_mosaic.version = 11 : i64} {
  func.func @_volume_sdf_color_kernel(%arg0: i32, %arg1: memref<1x1xf32, #tpu.memory_space<smem>>, %arg2: memref<128x128xbf16, #tpu.memory_space<vmem>>, %arg3: memref<128x384xbf16, #tpu.memory_space<vmem>>, %arg4: memref<384x3xbf16, #tpu.memory_space<vmem>>, %arg5: memref<16x128xf32, #tpu.memory_space<vmem>>, %arg6: memref<16x128xf32, #tpu.memory_space<vmem>>, %arg7: memref<16x384xf32, #tpu.memory_space<vmem>>, %arg8: memref<16x3xf32, #tpu.memory_space<vmem>>) attributes {dimension_semantics = [#tpu.dimension_semantics<parallel>], iteration_bounds = array<i64: 16>, scalar_prefetch = 0 : i64, scratch_operands = 0 : i64, tpu.core_type = #tpu.core_type<tc>, window_params = [{transform_indices = @transform_0, window_bounds = array<i64: 1, 1>}, {pipeline_mode = #tpu.pipeline_mode<synchronous>, transform_indices = @transform_1, window_bounds = array<i64: 128, 128>}, {pipeline_mode = #tpu.pipeline_mode<synchronous>, transform_indices = @transform_2, window_bounds = array<i64: 128, 384>}, {pipeline_mode = #tpu.pipeline_mode<synchronous>, transform_indices = @transform_3, window_bounds = array<i64: 384, 3>}, {transform_indices = @transform_4, window_bounds = array<i64: 16, 128>}, {transform_indices = @transform_5, window_bounds = array<i64: 16, 128>}, {transform_indices = @transform_6, window_bounds = array<i64: 16, 384>}, {transform_indices = @transform_7, window_bounds = array<i64: 16, 3>}]} {
    %c0 = arith.constant 0 : index
    %c0_0 = arith.constant 0 : index
    %0 = memref.load %arg1[%c0, %c0_0] : memref<1x1xf32, #tpu.memory_space<smem>>
    %c0_1 = arith.constant 0 : index
    %c0_2 = arith.constant 0 : index
    %1 = vector.load %arg5[%c0_1, %c0_2] : memref<16x128xf32, #tpu.memory_space<vmem>>, vector<16x128xf32>
    %c0_3 = arith.constant 0 : index
    %c0_4 = arith.constant 0 : index
    %2 = vector.load %arg6[%c0_3, %c0_4] : memref<16x128xf32, #tpu.memory_space<vmem>>, vector<16x128xf32>
    %c0_5 = arith.constant 0 : index
    %c0_6 = arith.constant 0 : index
    %3 = vector.load %arg7[%c0_5, %c0_6] : memref<16x384xf32, #tpu.memory_space<vmem>>, vector<16x384xf32>
    %4 = vector.broadcast %0 : f32 to vector<16x128xf32>
    %5 = arith.mulf %1, %4 : vector<16x128xf32>
    %6 = math.absf %5 : vector<16x128xf32>
    %cst = arith.constant 0.000000e+00 : f32
    %7 = vector.broadcast %cst : f32 to vector<16x128xf32>
    %8 = arith.subf %7, %6 : vector<16x128xf32>
    %9 = math.exp %8 : vector<16x128xf32>
    %cst_7 = arith.constant 1.000000e+00 : f32
    %10 = vector.broadcast %cst_7 : f32 to vector<16x128xf32>
    %11 = arith.addf %10, %9 : vector<16x128xf32>
    %12 = tpu.reciprocal %11 {approx = true} : vector<16x128xf32> -> vector<16x128xf32>
    %13 = arith.mulf %11, %12 : vector<16x128xf32>
    %cst_8 = arith.constant 2.000000e+00 : f32
    %14 = vector.broadcast %cst_8 : f32 to vector<16x128xf32>
    %15 = arith.subf %14, %13 : vector<16x128xf32>
    %16 = arith.mulf %12, %15 : vector<16x128xf32>
    %17 = arith.mulf %11, %16 : vector<16x128xf32>
    %cst_9 = arith.constant 2.000000e+00 : f32
    %18 = vector.broadcast %cst_9 : f32 to vector<16x128xf32>
    %19 = arith.subf %18, %17 : vector<16x128xf32>
    %20 = arith.mulf %16, %19 : vector<16x128xf32>
    %21 = vector.broadcast %0 : f32 to vector<16x128xf32>
    %22 = arith.mulf %21, %9 : vector<16x128xf32>
    %23 = arith.mulf %20, %20 : vector<16x128xf32>
    %24 = arith.mulf %22, %23 : vector<16x128xf32>
    %25 = vector.extract_strided_slice %2 {offsets = [0, 1], sizes = [16, 127], strides = [1, 1]} : vector<16x128xf32> to vector<16x127xf32>
    %26 = vector.extract_strided_slice %2 {offsets = [0, 0], sizes = [16, 127], strides = [1, 1]} : vector<16x128xf32> to vector<16x127xf32>
    %27 = arith.subf %25, %26 : vector<16x127xf32>
    %cst_10 = arith.constant 1.000000e+10 : f32
    %28 = vector.broadcast %cst_10 : f32 to vector<16x1xf32>
    %29 = tpu.concatenate %27, %28 in 1 : vector<16x127xf32>, vector<16x1xf32> -> vector<16x128xf32>
    %30 = arith.mulf %29, %24 : vector<16x128xf32>
    %c0_11 = arith.constant 0 : index
    %c0_12 = arith.constant 0 : index
    %31 = vector.load %arg2[%c0_11, %c0_12] : memref<128x128xbf16, #tpu.memory_space<vmem>>, vector<128x128xbf16>
    %32 = arith.truncf %30 : vector<16x128xf32> to vector<16x128xbf16>
    %cst_13 = arith.constant dense<0.000000e+00> : vector<16x128xf32>
    %33 = tpu.matmul %32, %31, %cst_13 {dimension_numbers = #tpu.dot_dimension_numbers<[1], [0], [0], [1], [0, 0, 1, 1], [], []>} : vector<16x128xbf16>, vector<128x128xbf16>, vector<16x128xf32> -> vector<16x128xf32>
    %34 = arith.extf %32 : vector<16x128xbf16> to vector<16x128xf32>
    %35 = arith.subf %30, %34 : vector<16x128xf32>
    %36 = arith.truncf %35 : vector<16x128xf32> to vector<16x128xbf16>
    %cst_14 = arith.constant dense<0.000000e+00> : vector<16x128xf32>
    %37 = tpu.matmul %36, %31, %cst_14 {dimension_numbers = #tpu.dot_dimension_numbers<[1], [0], [0], [1], [0, 0, 1, 1], [], []>} : vector<16x128xbf16>, vector<128x128xbf16>, vector<16x128xf32> -> vector<16x128xf32>
    %38 = arith.addf %33, %37 : vector<16x128xf32>
    %39 = arith.extf %36 : vector<16x128xbf16> to vector<16x128xf32>
    %40 = arith.subf %35, %39 : vector<16x128xf32>
    %41 = arith.truncf %40 : vector<16x128xf32> to vector<16x128xbf16>
    %cst_15 = arith.constant dense<0.000000e+00> : vector<16x128xf32>
    %42 = tpu.matmul %41, %31, %cst_15 {dimension_numbers = #tpu.dot_dimension_numbers<[1], [0], [0], [1], [0, 0, 1, 1], [], []>} : vector<16x128xbf16>, vector<128x128xbf16>, vector<16x128xf32> -> vector<16x128xf32>
    %43 = arith.addf %38, %42 : vector<16x128xf32>
    %cst_16 = arith.constant 0.000000e+00 : f32
    %44 = vector.broadcast %cst_16 : f32 to vector<16x128xf32>
    %45 = arith.subf %44, %43 : vector<16x128xf32>
    %46 = math.exp %45 : vector<16x128xf32>
    %cst_17 = arith.constant 1.000000e+00 : f32
    %47 = vector.broadcast %cst_17 : f32 to vector<16x1xf32>
    %48 = vector.extract_strided_slice %46 {offsets = [0, 0], sizes = [16, 127], strides = [1, 1]} : vector<16x128xf32> to vector<16x127xf32>
    %49 = tpu.concatenate %47, %48 in 1 : vector<16x1xf32>, vector<16x127xf32> -> vector<16x128xf32>
    %50 = arith.subf %49, %46 : vector<16x128xf32>
    %c0_18 = arith.constant 0 : index
    %c0_19 = arith.constant 0 : index
    %51 = vector.load %arg3[%c0_18, %c0_19] : memref<128x384xbf16, #tpu.memory_space<vmem>>, vector<128x384xbf16>
    %52 = arith.truncf %50 : vector<16x128xf32> to vector<16x128xbf16>
    %cst_20 = arith.constant dense<0.000000e+00> : vector<16x384xf32>
    %53 = tpu.matmul %52, %51, %cst_20 {dimension_numbers = #tpu.dot_dimension_numbers<[1], [0], [0], [1], [0, 0, 1, 1], [], []>} : vector<16x128xbf16>, vector<128x384xbf16>, vector<16x384xf32> -> vector<16x384xf32>
    %54 = arith.extf %52 : vector<16x128xbf16> to vector<16x128xf32>
    %55 = arith.subf %50, %54 : vector<16x128xf32>
    %56 = arith.truncf %55 : vector<16x128xf32> to vector<16x128xbf16>
    %cst_21 = arith.constant dense<0.000000e+00> : vector<16x384xf32>
    %57 = tpu.matmul %56, %51, %cst_21 {dimension_numbers = #tpu.dot_dimension_numbers<[1], [0], [0], [1], [0, 0, 1, 1], [], []>} : vector<16x128xbf16>, vector<128x384xbf16>, vector<16x384xf32> -> vector<16x384xf32>
    %58 = arith.addf %53, %57 : vector<16x384xf32>
    %59 = arith.extf %56 : vector<16x128xbf16> to vector<16x128xf32>
    %60 = arith.subf %55, %59 : vector<16x128xf32>
    %61 = arith.truncf %60 : vector<16x128xf32> to vector<16x128xbf16>
    %cst_22 = arith.constant dense<0.000000e+00> : vector<16x384xf32>
    %62 = tpu.matmul %61, %51, %cst_22 {dimension_numbers = #tpu.dot_dimension_numbers<[1], [0], [0], [1], [0, 0, 1, 1], [], []>} : vector<16x128xbf16>, vector<128x384xbf16>, vector<16x384xf32> -> vector<16x384xf32>
    %63 = arith.addf %58, %62 : vector<16x384xf32>
    %64 = arith.mulf %63, %3 : vector<16x384xf32>
    %c0_23 = arith.constant 0 : index
    %c0_24 = arith.constant 0 : index
    %65 = vector.load %arg4[%c0_23, %c0_24] : memref<384x3xbf16, #tpu.memory_space<vmem>>, vector<384x3xbf16>
    %66 = arith.truncf %64 : vector<16x384xf32> to vector<16x384xbf16>
    %cst_25 = arith.constant dense<0.000000e+00> : vector<16x3xf32>
    %67 = tpu.matmul %66, %65, %cst_25 {dimension_numbers = #tpu.dot_dimension_numbers<[1], [0], [0], [1], [0, 0, 1, 1], [], []>} : vector<16x384xbf16>, vector<384x3xbf16>, vector<16x3xf32> -> vector<16x3xf32>
    %68 = arith.extf %66 : vector<16x384xbf16> to vector<16x384xf32>
    %69 = arith.subf %64, %68 : vector<16x384xf32>
    %70 = arith.truncf %69 : vector<16x384xf32> to vector<16x384xbf16>
    %cst_26 = arith.constant dense<0.000000e+00> : vector<16x3xf32>
    %71 = tpu.matmul %70, %65, %cst_26 {dimension_numbers = #tpu.dot_dimension_numbers<[1], [0], [0], [1], [0, 0, 1, 1], [], []>} : vector<16x384xbf16>, vector<384x3xbf16>, vector<16x3xf32> -> vector<16x3xf32>
    %72 = arith.addf %67, %71 : vector<16x3xf32>
    %73 = arith.extf %70 : vector<16x384xbf16> to vector<16x384xf32>
    %74 = arith.subf %69, %73 : vector<16x384xf32>
    %75 = arith.truncf %74 : vector<16x384xf32> to vector<16x384xbf16>
    %cst_27 = arith.constant dense<0.000000e+00> : vector<16x3xf32>
    %76 = tpu.matmul %75, %65, %cst_27 {dimension_numbers = #tpu.dot_dimension_numbers<[1], [0], [0], [1], [0, 0, 1, 1], [], []>} : vector<16x384xbf16>, vector<384x3xbf16>, vector<16x3xf32> -> vector<16x3xf32>
    %77 = arith.addf %72, %76 : vector<16x3xf32>
    %c0_28 = arith.constant 0 : index
    %c0_29 = arith.constant 0 : index
    %78 = vector.load %arg8[%c0_28, %c0_29] : memref<16x3xf32, #tpu.memory_space<vmem>>, vector<16x3xf32>
    tpu.vector_store %arg8[%c0_28, %c0_29], %77 {strides = array<i32>} : memref<16x3xf32, #tpu.memory_space<vmem>>, vector<16x3xf32>,
    return
  }
  func.func @transform_0(%arg0: i32) -> (i32, i32) {
    %c0_i32 = arith.constant 0 : i32
    %c0_i32_0 = arith.constant 0 : i32
    %c0_i32_1 = arith.constant 0 : i32
    return %c0_i32, %c0_i32_0 : i32, i32
  }
  func.func @transform_1(%arg0: i32) -> (i32, i32) {
    %c0_i32 = arith.constant 0 : i32
    %c0_i32_0 = arith.constant 0 : i32
    %c0_i32_1 = arith.constant 0 : i32
    return %c0_i32, %c0_i32_0 : i32, i32
  }
  func.func @transform_2(%arg0: i32) -> (i32, i32) {
    %c0_i32 = arith.constant 0 : i32
    %c0_i32_0 = arith.constant 0 : i32
    %c0_i32_1 = arith.constant 0 : i32
    return %c0_i32, %c0_i32_0 : i32, i32
  }
  func.func @transform_3(%arg0: i32) -> (i32, i32) {
    %c0_i32 = arith.constant 0 : i32
    %c0_i32_0 = arith.constant 0 : i32
    %c0_i32_1 = arith.constant 0 : i32
    return %c0_i32, %c0_i32_0 : i32, i32
  }
  func.func @transform_4(%arg0: i32) -> (i32, i32) {
    %c0_i32 = arith.constant 0 : i32
    %c0_i32_0 = arith.constant 0 : i32
    return %arg0, %c0_i32 : i32, i32
  }
  func.func @transform_5(%arg0: i32) -> (i32, i32) {
    %c0_i32 = arith.constant 0 : i32
    %c0_i32_0 = arith.constant 0 : i32
    return %arg0, %c0_i32 : i32, i32
  }
  func.func @transform_6(%arg0: i32) -> (i32, i32) {
    %c0_i32 = arith.constant 0 : i32
    %c0_i32_0 = arith.constant 0 : i32
    return %arg0, %c0_i32 : i32, i32
  }
  func.func @transform_7(%arg0: i32) -> (i32, i32) {
    %c0_i32 = arith.constant 0 : i32
    %c0_i32_0 = arith.constant 0 : i32
    return %arg0, %c0_i32 : i32, i32
  }
}

</mosaic_0001>

<llo_original>
// kernel: _render_color_impl.1
$region0: #{_render_color_impl.1}
  #allocation0 [shape = 'u32[]', space=smem, size = 0x4, offset = 0x4, fixed_abs, tag = 'smem constant byte address 0x4 - core index']
  #allocation1 [shape = 'u32[72,128]{1,0:T(1,128)}', space=vmem, size = 0x9000, scoped, tag = 'internal scratch']
  #allocation2 [shape = 'f32[1,1]{1,0:T(1,128)S(6)}', space=smem, size = 0x200, scoped, tag = 'scoped memory for _render_color_impl.1']
  %s0 = inlined_call_operand.<no memory space> [shape: f32[1,1], index: 0, kind: input, shape index: {}]
  %s1 = inlined_call_operand.vmem [shape: bf16[128,128], index: 1, kind: input, shape index: {}]
  %s2 = inlined_call_operand.vmem [shape: bf16[128,384], index: 2, kind: input, shape index: {}]
  %s3 = inlined_call_operand.vmem [shape: bf16[384,3], index: 3, kind: input, shape index: {}]
  %s4 = inlined_call_operand.vmem [shape: f32[256,128], index: 4, kind: input, shape index: {}]
  %s5 = inlined_call_operand.vmem [shape: f32[256,128], index: 5, kind: input, shape index: {}]
  %s6 = inlined_call_operand.vmem [shape: f32[256,384], index: 6, kind: input, shape index: {}]
  %s7 = inlined_call_operand.vmem [shape: f32[256,3], index: 7, kind: output, shape index: {}]
  %s8 = sld [smem:[#allocation0]]
  $region61: #{_render_color_impl.1} parent=0
    _
  %s10 = ssub.s32 1, %s8
  %s11 = scalar_select 0, %s10, %s8
  %12 = sst [smem:[#allocation2]] %s0
  loop: start=0, step=1, limit=18
  $region2: #{_render_color_impl.1} parent=0 // loop_pre_header
    _
  $region3: #{_render_color_impl.1} parent=0 // loop_header
    %s14 = sphi 0, %s18
    %p15 = scmp.ge.s32.totalorder %s14, 18
    %s22 = sphi 0, %s22
    %s24 = sphi 0, %s22
    %s25 = sphi 0, %s24
    %s39 = sphi 0, %s25
    %s43 = sphi 0, %s43
    %s45 = sphi 0, %s43
    %s46 = sphi 0, %s45
    %s60 = sphi 0, %s46
    %s64 = sphi 0, %s64
    %s66 = sphi 0, %s64
    %s67 = sphi 0, %s66
    %s81 = sphi 0, %s67
    %s85 = sphi 0, %s85
    %s87 = sphi 0, %s85
    %s88 = sphi 0, %s87
    %s102 = sphi 0, %s88
    %s108 = sphi 0, %s110
    %s111 = sphi 0, %s108
    %s112 = sphi 0, %s111
    %s128 = sphi 0, %s112
    %s134 = sphi 0, %s136
    %s137 = sphi 0, %s134
    %s138 = sphi 0, %s137
    %s154 = sphi 0, %s138
    %s160 = sphi 0, %s162
    %s163 = sphi 0, %s160
    %s164 = sphi 0, %s163
    %s180 = sphi 0, %s164
    %s186 = sphi 0, %s188
    %s189 = sphi 0, %s186
    %s190 = sphi 0, %s189
    %s206 = sphi 0, %s190
  $region4: #{_render_color_impl.1} parent=0 // loop_header_branch
    %17 = sbr.rel (%p15) target = $region8
  $region5: #{_render_color_impl.1} parent=0 // loop_body
    %s19 = ssub.s32 %s14, 1
    %s20 = ssub.s32 %s14, 2
    %s21 = sadd.s32 %s14, 1
    %s23 = sadd.s32 %s22, 1
    %p26 = scmp.eq.s32.totalorder %s14, 15
    %p27 = scmp.ne.s32.totalorder %s22, %s24
    %p28 = scmp.eq.s32.totalorder %s14, 0
    %p29 = por %p27, %p28
    %p30 = scmp.ne.s32.totalorder %s22, %s24
    %p31 = scmp.eq.s32.totalorder %s19, 15
    %p32 = por %p30, %p31
    %p33 = scmp.ne.s32.totalorder %s24, %s25
    %p34 = scmp.eq.s32.totalorder %s19, 0
    %p35 = por %p33, %p34
    %p36 = scmp.ne.s32.totalorder %s24, %s25
    %p37 = scmp.eq.s32.totalorder %s20, 15
    %p38 = por %p36, %p37
    %p40 = scmp.ne.s32.totalorder %s25, %s39
    %p41 = scmp.eq.s32.totalorder %s20, 0
    %p42 = por %p40, %p41
    %s44 = sadd.s32 %s43, 1
    %p47 = scmp.eq.s32.totalorder %s14, 15
    %p48 = scmp.ne.s32.totalorder %s43, %s45
    %p49 = scmp.eq.s32.totalorder %s14, 0
    %p50 = por %p48, %p49
    %p51 = scmp.ne.s32.totalorder %s43, %s45
    %p52 = scmp.eq.s32.totalorder %s19, 15
    %p53 = por %p51, %p52
    %p54 = scmp.ne.s32.totalorder %s45, %s46
    %p55 = scmp.eq.s32.totalorder %s19, 0
    %p56 = por %p54, %p55
    %p57 = scmp.ne.s32.totalorder %s45, %s46
    %p58 = scmp.eq.s32.totalorder %s20, 15
    %p59 = por %p57, %p58
    %p61 = scmp.ne.s32.totalorder %s46, %s60
    %p62 = scmp.eq.s32.totalorder %s20, 0
    %p63 = por %p61, %p62
    %s65 = sadd.s32 %s64, 1
    %p68 = scmp.eq.s32.totalorder %s14, 15
    %p69 = scmp.ne.s32.totalorder %s64, %s66
    %p70 = scmp.eq.s32.totalorder %s14, 0
    %p71 = por %p69, %p70
    %p72 = scmp.ne.s32.totalorder %s64, %s66
    %p73 = scmp.eq.s32.totalorder %s19, 15
    %p74 = por %p72, %p73
    %p75 = scmp.ne.s32.totalorder %s66, %s67
    %p76 = scmp.eq.s32.totalorder %s19, 0
    %p77 = por %p75, %p76
    %p78 = scmp.ne.s32.totalorder %s66, %s67
    %p79 = scmp.eq.s32.totalorder %s20, 15
    %p80 = por %p78, %p79
    %p82 = scmp.ne.s32.totalorder %s67, %s81
    %p83 = scmp.eq.s32.totalorder %s20, 0
    %p84 = por %p82, %p83
    %s86 = sadd.s32 %s85, 1
    %p89 = scmp.eq.s32.totalorder %s14, 15
    %p90 = scmp.ne.s32.totalorder %s85, %s87
    %p91 = scmp.eq.s32.totalorder %s14, 0
    %p92 = por %p90, %p91
    %p93 = scmp.ne.s32.totalorder %s85, %s87
    %p94 = scmp.eq.s32.totalorder %s19, 15
    %p95 = por %p93, %p94
    %p96 = scmp.ne.s32.totalorder %s87, %s88
    %p97 = scmp.eq.s32.totalorder %s19, 0
    %p98 = por %p96, %p97
    %p99 = scmp.ne.s32.totalorder %s87, %s88
    %p100 = scmp.eq.s32.totalorder %s20, 15
    %p101 = por %p99, %p100
    %p103 = scmp.ne.s32.totalorder %s88, %s102
    %p104 = scmp.eq.s32.totalorder %s20, 0
    %p105 = por %p103, %p104
    %s106 = ssub.s32 %s14, %s21
    %p107 = scmp.eq.s32.totalorder %s106, 0
    %s109 = sadd.s32 %s108, 1
    %s110 = scalar_select %p107, %s108, %s109
    %p113 = pneg %p107
    %p114 = scmp.eq.s32.totalorder %s14, 15
    %p115 = por %p113, %p114
    %p116 = scmp.ne.s32.totalorder %s108, %s111
    %p117 = scmp.eq.s32.totalorder %s14, 0
    %p118 = por %p116, %p117
    %p119 = scmp.ne.s32.totalorder %s108, %s111
    %p120 = scmp.eq.s32.totalorder %s19, 15
    %p121 = por %p119, %p120
    %p122 = scmp.ne.s32.totalorder %s111, %s112
    %p123 = scmp.eq.s32.totalorder %s19, 0
    %p124 = por %p122, %p123
    %p125 = scmp.ne.s32.totalorder %s111, %s112
    %p126 = scmp.eq.s32.totalorder %s20, 15
    %p127 = por %p125, %p126
    %p129 = scmp.ne.s32.totalorder %s112, %s128
    %p130 = scmp.eq.s32.totalorder %s20, 0
    %p131 = por %p129, %p130
    %s132 = ssub.s32 %s14, %s21
    %p133 = scmp.eq.s32.totalorder %s132, 0
    %s135 = sadd.s32 %s134, 1
    %s136 = scalar_select %p133, %s134, %s135
    %p139 = pneg %p133
    %p140 = scmp.eq.s32.totalorder %s14, 15
    %p141 = por %p139, %p140
    %p142 = scmp.ne.s32.totalorder %s134, %s137
    %p143 = scmp.eq.s32.totalorder %s14, 0
    %p144 = por %p142, %p143
    %p145 = scmp.ne.s32.totalorder %s134, %s137
    %p146 = scmp.eq.s32.totalorder %s19, 15
    %p147 = por %p145, %p146
    %p148 = scmp.ne.s32.totalorder %s137, %s138
    %p149 = scmp.eq.s32.totalorder %s19, 0
    %p150 = por %p148, %p149
    %p151 = scmp.ne.s32.totalorder %s137, %s138
    %p152 = scmp.eq.s32.totalorder %s20, 15
    %p153 = por %p151, %p152
    %p155 = scmp.ne.s32.totalorder %s138, %s154
    %p156 = scmp.eq.s32.totalorder %s20, 0
    %p157 = por %p155, %p156
    %s158 = ssub.s32 %s14, %s21
    %p159 = scmp.eq.s32.totalorder %s158, 0
    %s161 = sadd.s32 %s160, 1
    %s162 = scalar_select %p159, %s160, %s161
    %p165 = pneg %p159
    %p166 = scmp.eq.s32.totalorder %s14, 15
    %p167 = por %p165, %p166
    %p168 = scmp.ne.s32.totalorder %s160, %s163
    %p169 = scmp.eq.s32.totalorder %s14, 0
    %p170 = por %p168, %p169
    %p171 = scmp.ne.s32.totalorder %s160, %s163
    %p172 = scmp.eq.s32.totalorder %s19, 15
    %p173 = por %p171, %p172
    %p174 = scmp.ne.s32.totalorder %s163, %s164
    %p175 = scmp.eq.s32.totalorder %s19, 0
    %p176 = por %p174, %p175
    %p177 = scmp.ne.s32.totalorder %s163, %s164
    %p178 = scmp.eq.s32.totalorder %s20, 15
    %p179 = por %p177, %p178
    %p181 = scmp.ne.s32.totalorder %s164, %s180
    %p182 = scmp.eq.s32.totalorder %s20, 0
    %p183 = por %p181, %p182
    %s184 = ssub.s32 %s14, %s21
    %p185 = scmp.eq.s32.totalorder %s184, 0
    %s187 = sadd.s32 %s186, 1
    %s188 = scalar_select %p185, %s186, %s187
    %p191 = pneg %p185
    %p192 = scmp.eq.s32.totalorder %s14, 15
    %p193 = por %p191, %p192
    %p194 = scmp.ne.s32.totalorder %s186, %s189
    %p195 = scmp.eq.s32.totalorder %s14, 0
    %p196 = por %p194, %p195
    %p197 = scmp.ne.s32.totalorder %s186, %s189
    %p198 = scmp.eq.s32.totalorder %s19, 15
    %p199 = por %p197, %p198
    %p200 = scmp.ne.s32.totalorder %s189, %s190
    %p201 = scmp.eq.s32.totalorder %s19, 0
    %p202 = por %p200, %p201
    %p203 = scmp.ne.s32.totalorder %s189, %s190
    %p204 = scmp.eq.s32.totalorder %s20, 15
    %p205 = por %p203, %p204
    %p207 = scmp.ne.s32.totalorder %s190, %s206
    %p208 = scmp.eq.s32.totalorder %s20, 0
    %p209 = por %p207, %p208
    %p210 = scmp.le.s32.totalorder 1, %s14
    %p211 = scmp.lt.s32.totalorder %s14, 17
    %p212 = pnand %p210, %p211
    %p213 = pneg %p212
    // Predicated region
    $region9: #{_render_color_impl.1} parent=5 // pred_check
      _
    $region10: #{_render_color_impl.1} parent=5 // pred_check_branch
      %215 = sbr.rel (%p212) target = $region12
    $region11: #{_render_color_impl.1} parent=5 // pred_region
      %s216 = ssub.s32 %s14, 1
      // Predicated region
      $region13: #{_render_color_impl.1} parent=11 // pred_check
        %p217 = pneg %p35
      $region14: #{_render_color_impl.1} parent=11 // pred_check_branch
        %219 = sbr.rel (%p217) target = $region16
      $region15: #{_render_color_impl.1} parent=11 // pred_region
        _
      $region16: #{_render_color_impl.1} parent=11 // pred_fallthru
        _
      // Predicated region
      $region17: #{_render_color_impl.1} parent=11 // pred_check
        %p220 = pneg %p56
      $region18: #{_render_color_impl.1} parent=11 // pred_check_branch
        %222 = sbr.rel (%p220) target = $region20
      $region19: #{_render_color_impl.1} parent=11 // pred_region
        _
      $region20: #{_render_color_impl.1} parent=11 // pred_fallthru
        _
      // Predicated region
      $region21: #{_render_color_impl.1} parent=11 // pred_check
        %p223 = pneg %p77
      $region22: #{_render_color_impl.1} parent=11 // pred_check_branch
        %225 = sbr.rel (%p223) target = $region24
      $region23: #{_render_color_impl.1} parent=11 // pred_region
        _
      $region24: #{_render_color_impl.1} parent=11 // pred_fallthru
        _
      // Predicated region
      $region25: #{_render_color_impl.1} parent=11 // pred_check
        %p226 = pneg %p98
      $region26: #{_render_color_impl.1} parent=11 // pred_check_branch
        %228 = sbr.rel (%p226) target = $region28
      $region27: #{_render_color_impl.1} parent=11 // pred_region
        _
      $region28: #{_render_color_impl.1} parent=11 // pred_fallthru
        _
    $region12: #{_render_color_impl.1} parent=5 // pred_fallthru
      _
    %p229 = scmp.lt.s32.totalorder %s14, 16
    // Predicated region
    $region29: #{_render_color_impl.1} parent=5 // pred_check
      %p230 = pneg %p229
    $region30: #{_render_color_impl.1} parent=5 // pred_check_branch
      %232 = sbr.rel (%p230) target = $region32
    $region31: #{_render_color_impl.1} parent=5 // pred_region
      // Predicated region
      $region33: #{_render_color_impl.1} parent=31 // pred_check
        %p233 = pneg %p118
      $region34: #{_render_color_impl.1} parent=31 // pred_check_branch
        %235 = sbr.rel (%p233) target = $region36
      $region35: #{_render_color_impl.1} parent=31 // pred_region
        %s236 = smul.u32 2, %s14
        %p237 = scmp.lt.s32.totalorder %s236, 31
        %s238 = scalar_select %p237, %s236, 31
        %s239 = smul.addr %s238, 8
        %s240 = scalar_lea.vmem %s4, %s239
        %s241 = smul.u32 2, %s14
      $region36: #{_render_color_impl.1} parent=31 // pred_fallthru
        _
      // Predicated region
      $region37: #{_render_color_impl.1} parent=31 // pred_check
        %p242 = pneg %p144
      $region38: #{_render_color_impl.1} parent=31 // pred_check_branch
        %244 = sbr.rel (%p242) target = $region40
      $region39: #{_render_color_impl.1} parent=31 // pred_region
        %s245 = smul.u32 2, %s14
        %p246 = scmp.lt.s32.totalorder %s245, 31
        %s247 = scalar_select %p246, %s245, 31
        %s248 = smul.addr %s247, 8
        %s249 = scalar_lea.vmem %s5, %s248
        %s250 = smul.u32 2, %s14
      $region40: #{_render_color_impl.1} parent=31 // pred_fallthru
        _
      // Predicated region
      $region41: #{_render_color_impl.1} parent=31 // pred_check
        %p251 = pneg %p170
      $region42: #{_render_color_impl.1} parent=31 // pred_check_branch
        %253 = sbr.rel (%p251) target = $region44
      $region43: #{_render_color_impl.1} parent=31 // pred_region
        %s254 = smul.u32 2, %s14
        %p255 = scmp.lt.s32.totalorder %s254, 31
        %s256 = scalar_select %p255, %s254, 31
        %s257 = smul.addr %s256, 3
        %s258 = smul.addr %s257, 8
        %s259 = scalar_lea.vmem %s6, %s258
        %s260 = smul.u32 2, %s14
      $region44: #{_render_color_impl.1} parent=31 // pred_fallthru
        _
    $region32: #{_render_color_impl.1} parent=5 // pred_fallthru
      _
    %p261 = scmp.le.s32.totalorder 1, %s14
    %p262 = scmp.lt.s32.totalorder %s14, 17
    %p263 = pnand %p261, %p262
    %p264 = pneg %p263
    // Predicated region
    $region45: #{_render_color_impl.1} parent=5 // pred_check
      _
    $region46: #{_render_color_impl.1} parent=5 // pred_check_branch
      %266 = sbr.rel (%p263) target = $region48
    $region47: #{_render_color_impl.1} parent=5 // pred_region
      %s267 = ssub.s32 %s14, 1
      %p268 = pneg %p35
      %p269 = pneg %p32
      %p270 = pneg %p56
      %p271 = pneg %p53
      %p272 = pneg %p77
      %p273 = pneg %p74
      %p274 = pneg %p98
      %p275 = pneg %p95
      %s276 = smul.u32 2, %s19
      %p277 = scmp.lt.s32.totalorder %s276, 31
      %s278 = scalar_select %p277, %s276, 31
      %s279 = smul.addr %s278, 8
      %s280 = scalar_lea.vmem %s4, %s279
      %p281 = pneg %p124
      %p282 = pneg %p121
      %s283 = smul.u32 2, %s19
      %p284 = scmp.lt.s32.totalorder %s283, 31
      %s285 = scalar_select %p284, %s283, 31
      %s286 = smul.addr %s285, 8
      %s287 = scalar_lea.vmem %s5, %s286
      %p288 = pneg %p150
      %p289 = pneg %p147
      %s290 = smul.u32 2, %s19
      %p291 = scmp.lt.s32.totalorder %s290, 31
      %s292 = scalar_select %p291, %s290, 31
      %s293 = smul.addr %s292, 3
      %s294 = smul.addr %s293, 8
      %s295 = scalar_lea.vmem %s6, %s294
      %p296 = pneg %p176
      %p297 = pneg %p173
      %p298 = pneg %p202
      %p299 = pneg %p199
      %s300 = smul.u32 2, %s19
      %p301 = scmp.lt.s32.totalorder %s300, 31
      %s302 = scalar_select %p301, %s300, 31
      %s303 = smul.addr %s302, 8
      %s304 = scalar_lea.vmem %s7, %s303
      %s305 = smul.u32 2, %s19
      %p306 = scmp.lt.s32.totalorder %s305, 31
      %s307 = scalar_select %p306, %s305, 31
      %s308 = smul.addr %s307, 8
      %s309 = scalar_lea.vmem %s4, %s308
      %s310 = smul.u32 2, %s19
      %s311 = smul.u32 2, %s19
      %p312 = scmp.lt.s32.totalorder %s311, 31
      %s313 = scalar_select %p312, %s311, 31
      %s314 = smul.addr %s313, 8
      %s315 = scalar_lea.vmem %s5, %s314
      %s316 = smul.u32 2, %s19
      %s317 = smul.u32 2, %s19
      %p318 = scmp.lt.s32.totalorder %s317, 31
      %s319 = scalar_select %p318, %s317, 31
      %s320 = smul.addr %s319, 3
      %s321 = smul.addr %s320, 8
      %s322 = scalar_lea.vmem %s6, %s321
      %s323 = smul.u32 2, %s19
      %s324 = smul.u32 2, %s19
      %p325 = scmp.lt.s32.totalorder %s324, 31
      %s326 = scalar_select %p325, %s324, 31
      %s327 = smul.addr %s326, 8
      %s328 = scalar_lea.vmem %s7, %s327
      %s329 = smul.u32 2, %s19
      %s330 = sld [smem:[#allocation2]]
      %v331 = vld [vmem:[%s309] sm:$0xff]
      %v332 = vld [vmem:[%s309 + $0x8] sm:$0xff]
      %v333 = vld [vmem:[%s315] sm:$0xff]
      %v334 = vld [vmem:[%s315 + $0x8] sm:$0xff]
      %v335 = vld [vmem:[%s322] sm:$0xff]
      %v336 = vld [vmem:[%s322 + $0x8] sm:$0xff]
      %v337 = vld [vmem:[%s322 + $0x10] sm:$0xff]
      %v338 = vld [vmem:[%s322 + $0x18] sm:$0xff]
      %v339 = vld [vmem:[%s322 + $0x20] sm:$0xff]
      %v340 = vld [vmem:[%s322 + $0x28] sm:$0xff]
      %v341 = vstv %s330
      %v342 = vmul.f32 %v331, %v341
      %v343 = vmul.f32 %v332, %v341
      %v344 = vand.u32 2147483647, %v342
      %v345 = vand.u32 2147483647, %v343
      %v346 = vsub.f32 0.0, %v344
      %v347 = vsub.f32 0.0, %v345
      %v348 = vmul.f32 %v346, 1.442695
      %v349 = vpow.pop %v348
      %v350 = vmul.f32 %v347, 1.442695
      %v351 = vpow.pop %v350
      %v352 = vadd.f32 %v349, 1.0
      %v353 = vadd.f32 %v351, 1.0
      %v354 = vrcp.pop %v352
      %v355 = vrcp.pop %v353
      %v356 = vmul.f32 %v352, %v354
      %v357 = vmul.f32 %v353, %v355
      %v358 = vsub.f32 2.0, %v356
      %v359 = vsub.f32 2.0, %v357
      %v360 = vmul.f32 %v354, %v358
      %v361 = vmul.f32 %v355, %v359
      %v362 = vmul.f32 %v352, %v360
      %v363 = vmul.f32 %v353, %v361
      %v364 = vsub.f32 2.0, %v362
      %v365 = vsub.f32 2.0, %v363
      %v366 = vmul.f32 %v360, %v364
      %v367 = vmul.f32 %v361, %v365
      %v368 = vmul.f32 %v341, %v349
      %v369 = vmul.f32 %v341, %v351
      %v370 = vmul.f32 %v366, %v366
      %v371 = vmul.f32 %v367, %v367
      %v372 = vmul.f32 %v368, %v370
      %v373 = vmul.f32 %v369, %v371
      %376 = vrot.lane.b32.xlu0 %v333, 1
      %v377 = vpop.permute.xlu0 %376
      %378 = vrot.lane.b32.xlu0 %v334, 1
      %v379 = vpop.permute.xlu0 %378
      %v382 = vsub.f32 %v333, %v377
      %v383 = vsub.f32 %v334, %v379
      %386 = vrot.lane.b32.xlu0 %v382, 127
      %v387 = vpop.permute.xlu0 %386
      %388 = vrot.lane.b32.xlu0 %v383, 127
      %v389 = vpop.permute.xlu0 %388
      %vm392 = vcmask 1039360
      %v393 = vsel %vm392, %v387, 1e+10
      %v394 = vsel %vm392, %v389, 1e+10
      %v395 = vmul.f32 %v393, %v372
      %v396 = vmul.f32 %v394, %v373
      %v397 = vld [vmem:[%s1] sm:$0xf]
      %v398 = vld [vmem:[%s1 + $0x4] sm:$0xf]
      %v399 = vld [vmem:[%s1 + $0x8] sm:$0xf]
      %v400 = vld [vmem:[%s1 + $0xc] sm:$0xf]
      %v401 = vld [vmem:[%s1 + $0x10] sm:$0xf]
      %v402 = vld [vmem:[%s1 + $0x14] sm:$0xf]
      %v403 = vld [vmem:[%s1 + $0x18] sm:$0xf]
      %v404 = vld [vmem:[%s1 + $0x1c] sm:$0xf]
      %v405 = vld [vmem:[%s1 + $0x20] sm:$0xf]
      %v406 = vld [vmem:[%s1 + $0x24] sm:$0xf]
      %v407 = vld [vmem:[%s1 + $0x28] sm:$0xf]
      %v408 = vld [vmem:[%s1 + $0x2c] sm:$0xf]
      %v409 = vld [vmem:[%s1 + $0x30] sm:$0xf]
      %v410 = vld [vmem:[%s1 + $0x34] sm:$0xf]
      %v411 = vld [vmem:[%s1 + $0x38] sm:$0xf]
      %v412 = vld [vmem:[%s1 + $0x3c] sm:$0xf]
      %v413 = vpack.c.bf16 %v395, %v395
      %v414 = vpack.c.bf16 %v396, %v396
      %v415 = vunpack.c.l.bf16 %v413
      %v416 = vunpack.c.l.bf16 %v414
      %v417 = vsub.f32 %v395, %v415
      %v418 = vsub.f32 %v396, %v416
      %v419 = vpack.c.bf16 %v417, %v417
      %v420 = vpack.c.bf16 %v418, %v418
      %v423 = vunpack.c.l.b16 %v419
      %v424 = vunpack.c.l.b16 %v420
      %v425 = vpack.c.b16 %v424, %v423
      %v443 = vunpack.c.l.b16 %v397
      %v444 = vunpack.c.l.b16 %v398
      %v445 = vunpack.c.l.b16 %v399
      %v446 = vunpack.c.l.b16 %v400
      %v447 = vunpack.c.l.b16 %v401
      %v448 = vunpack.c.l.b16 %v402
      %v449 = vunpack.c.l.b16 %v403
      %v450 = vunpack.c.l.b16 %v404
      %v451 = vunpack.c.l.b16 %v405
      %v452 = vunpack.c.l.b16 %v406
      %v453 = vunpack.c.l.b16 %v407
      %v454 = vunpack.c.l.b16 %v408
      %v455 = vunpack.c.l.b16 %v409
      %v456 = vunpack.c.l.b16 %v410
      %v457 = vunpack.c.l.b16 %v411
      %v458 = vunpack.c.l.b16 %v412
      %v459 = vpack.c.b16 %v444, %v443
      %v460 = vpack.c.b16 %v446, %v445
      %v461 = vpack.c.b16 %v448, %v447
      %v462 = vpack.c.b16 %v450, %v449
      %v463 = vpack.c.b16 %v452, %v451
      %v464 = vpack.c.b16 %v454, %v453
      %v465 = vpack.c.b16 %v456, %v455
      %v466 = vpack.c.b16 %v458, %v457
      %475 = vmatpush.bf16.msra.mxu0 %v466
      %476 = vmatpush.bf16.msra.mxu0 %v465
      %477 = vmatpush.bf16.msra.mxu0 %v464
      %478 = vmatpush.bf16.msra.mxu0 %v463
      %479 = vmatpush.bf16.msra.mxu0 %v462
      %480 = vmatpush.bf16.msra.mxu0 %v461
      %481 = vmatpush.bf16.msra.mxu0 %v460
      %482 = vmatpush.bf16.msra.mxu0 %v459
      %483 = vmatmul.bf16.gmra.mxu0 %v425
      %v484 = vpop.f32.mrf.mxu0
      %v485 = vadd.f32 0.0, %v484
      %v486 = vpop.f32.mrf.mxu0
      %v487 = vadd.f32 0.0, %v486
      %488 = vdwg.mxu0
      %v491 = vunpack.c.l.b16 %v413
      %v492 = vunpack.c.l.b16 %v414
      %v493 = vpack.c.b16 %v492, %v491
      %495 = vmatpush.bf16.msra.mxu0 %v466
      %496 = vmatpush.bf16.msra.mxu0 %v465
      %497 = vmatpush.bf16.msra.mxu0 %v464
      %498 = vmatpush.bf16.msra.mxu0 %v463
      %499 = vmatpush.bf16.msra.mxu0 %v462
      %500 = vmatpush.bf16.msra.mxu0 %v461
      %501 = vmatpush.bf16.msra.mxu0 %v460
      %502 = vmatpush.bf16.msra.mxu0 %v459
      %503 = vmatmul.bf16.gmra.mxu0 %v493
      %v504 = vpop.f32.mrf.mxu0
      %v505 = vadd.f32 %v485, %v504
      %v506 = vpop.f32.mrf.mxu0
      %v507 = vadd.f32 %v487, %v506
      %508 = vdwg.mxu0
      %v509 = vunpack.c.l.bf16 %v419
      %v510 = vunpack.c.l.bf16 %v420
      %v511 = vsub.f32 %v417, %v509
      %v512 = vsub.f32 %v418, %v510
      %v513 = vpack.c.bf16 %v512, %v511
      %514 = vmatpush.bf16.msra.mxu0 %v466
      %515 = vmatpush.bf16.msra.mxu0 %v465
      %516 = vmatpush.bf16.msra.mxu0 %v464
      %517 = vmatpush.bf16.msra.mxu0 %v463
      %518 = vmatpush.bf16.msra.mxu0 %v462
      %519 = vmatpush.bf16.msra.mxu0 %v461
      %520 = vmatpush.bf16.msra.mxu0 %v460
      %521 = vmatpush.bf16.msra.mxu0 %v459
      %522 = vmatmul.bf16.gmra.mxu0 %v513
      %v523 = vpop.f32.mrf.mxu0
      %v524 = vadd.f32 0.0, %v523
      %v525 = vpop.f32.mrf.mxu0
      %v526 = vadd.f32 0.0, %v525
      %527 = vdwg.mxu0
      %v528 = vadd.f32 %v505, %v524
      %v529 = vadd.f32 %v507, %v526
      %v530 = vsub.f32 0.0, %v528
      %v531 = vsub.f32 0.0, %v529
      %v532 = vmul.f32 %v530, 1.442695
      %v533 = vpow.pop %v532
      %v534 = vmul.f32 %v531, 1.442695
      %v535 = vpow.pop %v534
      %538 = vrot.lane.b32.xlu0 %v533, 1
      %v539 = vpop.permute.xlu0 %538
      %540 = vrot.lane.b32.xlu0 %v535, 1
      %v541 = vpop.permute.xlu0 %540
      %vm544 = vcmask 7168
      %v545 = vsel %vm544, 1.0, %v539
      %v546 = vsel %vm544, 1.0, %v541
      %v547 = vsub.f32 %v545, %v533
      %v548 = vsub.f32 %v546, %v535
      %v549 = vld [vmem:[%s2] sm:$0xff]
      %v550 = vld [vmem:[%s2 + $0x8] sm:$0xf]
      %v551 = vld [vmem:[%s2 + $0xc] sm:$0xff]
      %v552 = vld [vmem:[%s2 + $0x14] sm:$0xf]
      %v553 = vld [vmem:[%s2 + $0x18] sm:$0xff]
      %v554 = vld [vmem:[%s2 + $0x20] sm:$0xf]
      %v555 = vld [vmem:[%s2 + $0x24] sm:$0xff]
      %v556 = vld [vmem:[%s2 + $0x2c] sm:$0xf]
      %v557 = vld [vmem:[%s2 + $0x30] sm:$0xff]
      %v558 = vld [vmem:[%s2 + $0x38] sm:$0xf]
      %v559 = vld [vmem:[%s2 + $0x3c] sm:$0xff]
      %v560 = vld [vmem:[%s2 + $0x44] sm:$0xf]
      %v561 = vld [vmem:[%s2 + $0x48] sm:$0xff]
      %v562 = vld [vmem:[%s2 + $0x50] sm:$0xf]
      %v563 = vld [vmem:[%s2 + $0x54] sm:$0xff]
      %v564 = vld [vmem:[%s2 + $0x5c] sm:$0xf]
      %v565 = vld [vmem:[%s2 + $0x60] sm:$0xff]
      %v566 = vld [vmem:[%s2 + $0x68] sm:$0xf]
      %v567 = vld [vmem:[%s2 + $0x6c] sm:$0xff]
      %v568 = vld [vmem:[%s2 + $0x74] sm:$0xf]
      %v569 = vld [vmem:[%s2 + $0x78] sm:$0xff]
      %v570 = vld [vmem:[%s2 + $0x80] sm:$0xf]
      %v571 = vld [vmem:[%s2 + $0x84] sm:$0xff]
      %v572 = vld [vmem:[%s2 + $0x8c] sm:$0xf]
      %v573 = vld [vmem:[%s2 + $0x90] sm:$0xff]
      %v574 = vld [vmem:[%s2 + $0x98] sm:$0xf]
      %v575 = vld [vmem:[%s2 + $0x9c] sm:$0xff]
      %v576 = vld [vmem:[%s2 + $0xa4] sm:$0xf]
      %v577 = vld [vmem:[%s2 + $0xa8] sm:$0xff]
      %v578 = vld [vmem:[%s2 + $0xb0] sm:$0xf]
      %v579 = vld [vmem:[%s2 + $0xb4] sm:$0xff]
      %v580 = vld [vmem:[%s2 + $0xbc] sm:$0xf]
      %v581 = vpack.c.bf16 %v547, %v547
      %v582 = vpack.c.bf16 %v548, %v548
      %v583 = vunpack.c.l.bf16 %v581
      %v584 = vunpack.c.l.bf16 %v582
      %v585 = vsub.f32 %v547, %v583
      %v586 = vsub.f32 %v548, %v584
      %v587 = vpack.c.bf16 %v585, %v585
      %v588 = vpack.c.bf16 %v586, %v586
      %v591 = vunpack.c.l.b16 %v587
      %v592 = vunpack.c.l.b16 %v588
      %v593 = vpack.c.b16 %v592, %v591
      %v627 = vunpack.c.l.b16 %v549
      %v628 = vunpack.c.h.b16 %v549
      %v629 = vunpack.c.l.b16 %v550
      %v630 = vunpack.c.l.b16 %v551
      %v631 = vunpack.c.h.b16 %v551
      %v632 = vunpack.c.l.b16 %v552
      %v633 = vunpack.c.l.b16 %v553
      %v634 = vunpack.c.h.b16 %v553
      %v635 = vunpack.c.l.b16 %v554
      %v636 = vunpack.c.l.b16 %v555
      %v637 = vunpack.c.h.b16 %v555
      %v638 = vunpack.c.l.b16 %v556
      %v639 = vunpack.c.l.b16 %v557
      %v640 = vunpack.c.h.b16 %v557
      %v641 = vunpack.c.l.b16 %v558
      %v642 = vunpack.c.l.b16 %v559
      %v643 = vunpack.c.h.b16 %v559
      %v644 = vunpack.c.l.b16 %v560
      %v645 = vunpack.c.l.b16 %v561
      %v646 = vunpack.c.h.b16 %v561
      %v647 = vunpack.c.l.b16 %v562
      %v648 = vunpack.c.l.b16 %v563
      %v649 = vunpack.c.h.b16 %v563
      %v650 = vunpack.c.l.b16 %v564
      %v651 = vunpack.c.l.b16 %v565
      %v652 = vunpack.c.h.b16 %v565
      %v653 = vunpack.c.l.b16 %v566
      %v654 = vunpack.c.l.b16 %v567
      %v655 = vunpack.c.h.b16 %v567
      %v656 = vunpack.c.l.b16 %v568
      %v657 = vunpack.c.l.b16 %v569
      %v658 = vunpack.c.h.b16 %v569
      %v659 = vunpack.c.l.b16 %v570
      %v660 = vunpack.c.l.b16 %v571
      %v661 = vunpack.c.h.b16 %v571
      %v662 = vunpack.c.l.b16 %v572
      %v663 = vunpack.c.l.b16 %v573
      %v664 = vunpack.c.h.b16 %v573
      %v665 = vunpack.c.l.b16 %v574
      %v666 = vunpack.c.l.b16 %v575
      %v667 = vunpack.c.h.b16 %v575
      %v668 = vunpack.c.l.b16 %v576
      %v669 = vunpack.c.l.b16 %v577
      %v670 = vunpack.c.h.b16 %v577
      %v671 = vunpack.c.l.b16 %v578
      %v672 = vunpack.c.l.b16 %v579
      %v673 = vunpack.c.h.b16 %v579
      %v674 = vunpack.c.l.b16 %v580
      %v675 = vpack.c.b16 %v630, %v627
      %v676 = vpack.c.b16 %v631, %v628
      %v677 = vpack.c.b16 %v632, %v629
      %v678 = vpack.c.b16 %v636, %v633
      %v679 = vpack.c.b16 %v637, %v634
      %v680 = vpack.c.b16 %v638, %v635
      %v681 = vpack.c.b16 %v642, %v639
      %v682 = vpack.c.b16 %v643, %v640
      %v683 = vpack.c.b16 %v644, %v641
      %v684 = vpack.c.b16 %v648, %v645
      %v685 = vpack.c.b16 %v649, %v646
      %v686 = vpack.c.b16 %v650, %v647
      %v687 = vpack.c.b16 %v654, %v651
      %v688 = vpack.c.b16 %v655, %v652
      %v689 = vpack.c.b16 %v656, %v653
      %v690 = vpack.c.b16 %v660, %v657
      %v691 = vpack.c.b16 %v661, %v658
      %v692 = vpack.c.b16 %v662, %v659
      %v693 = vpack.c.b16 %v666, %v663
      %v694 = vpack.c.b16 %v667, %v664
      %v695 = vpack.c.b16 %v668, %v665
      %v696 = vpack.c.b16 %v672, %v669
      %v697 = vpack.c.b16 %v673, %v670
      %v698 = vpack.c.b16 %v674, %v671
      %723 = vmatpush.bf16.msra.mxu0 %v696
      %724 = vmatpush.bf16.msra.mxu0 %v693
      %725 = vmatpush.bf16.msra.mxu0 %v690
      %726 = vmatpush.bf16.msra.mxu0 %v687
      %727 = vmatpush.bf16.msra.mxu0 %v684
      %728 = vmatpush.bf16.msra.mxu0 %v681
      %729 = vmatpush.bf16.msra.mxu0 %v678
      %730 = vmatpush.bf16.msra.mxu0 %v675
      %731 = vmatmul.bf16.gmra.mxu0 %v593
      %v732 = vpop.f32.mrf.mxu0
      %v733 = vadd.f32 0.0, %v732
      %v734 = vpop.f32.mrf.mxu0
      %v735 = vadd.f32 0.0, %v734
      %736 = vdwg.mxu0
      %737 = vmatpush.bf16.msra.mxu0 %v697
      %738 = vmatpush.bf16.msra.mxu0 %v694
      %739 = vmatpush.bf16.msra.mxu0 %v691
      %740 = vmatpush.bf16.msra.mxu0 %v688
      %741 = vmatpush.bf16.msra.mxu0 %v685
      %742 = vmatpush.bf16.msra.mxu0 %v682
      %743 = vmatpush.bf16.msra.mxu0 %v679
      %744 = vmatpush.bf16.msra.mxu0 %v676
      %745 = vmatmul.bf16.gmra.mxu0 %v593
      %v746 = vpop.f32.mrf.mxu0
      %v747 = vadd.f32 0.0, %v746
      %v748 = vpop.f32.mrf.mxu0
      %v749 = vadd.f32 0.0, %v748
      %750 = vdwg.mxu0
      %751 = vmatpush.bf16.msra.mxu0 %v698
      %752 = vmatpush.bf16.msra.mxu0 %v695
      %753 = vmatpush.bf16.msra.mxu0 %v692
      %754 = vmatpush.bf16.msra.mxu0 %v689
      %755 = vmatpush.bf16.msra.mxu0 %v686
      %756 = vmatpush.bf16.msra.mxu0 %v683
      %757 = vmatpush.bf16.msra.mxu0 %v680
      %758 = vmatpush.bf16.msra.mxu0 %v677
      %759 = vmatmul.bf16.gmra.mxu0 %v593
      %v760 = vpop.f32.mrf.mxu0
      %v761 = vadd.f32 0.0, %v760
      %v762 = vpop.f32.mrf.mxu0
      %v763 = vadd.f32 0.0, %v762
      %764 = vdwg.mxu0
      %v767 = vunpack.c.l.b16 %v581
      %v768 = vunpack.c.l.b16 %v582
      %v769 = vpack.c.b16 %v768, %v767
      %771 = vmatpush.bf16.msra.mxu0 %v696
      %772 = vmatpush.bf16.msra.mxu0 %v693
      %773 = vmatpush.bf16.msra.mxu0 %v690
      %774 = vmatpush.bf16.msra.mxu0 %v687
      %775 = vmatpush.bf16.msra.mxu0 %v684
      %776 = vmatpush.bf16.msra.mxu0 %v681
      %777 = vmatpush.bf16.msra.mxu0 %v678
      %778 = vmatpush.bf16.msra.mxu0 %v675
      %779 = vmatmul.bf16.gmra.mxu0 %v769
      %v780 = vpop.f32.mrf.mxu0
      %v781 = vadd.f32 %v733, %v780
      %v782 = vpop.f32.mrf.mxu0
      %v783 = vadd.f32 %v735, %v782
      %784 = vdwg.mxu0
      %785 = vmatpush.bf16.msra.mxu0 %v697
      %786 = vmatpush.bf16.msra.mxu0 %v694
      %787 = vmatpush.bf16.msra.mxu0 %v691
      %788 = vmatpush.bf16.msra.mxu0 %v688
      %789 = vmatpush.bf16.msra.mxu0 %v685
      %790 = vmatpush.bf16.msra.mxu0 %v682
      %791 = vmatpush.bf16.msra.mxu0 %v679
      %792 = vmatpush.bf16.msra.mxu0 %v676
      %793 = vmatmul.bf16.gmra.mxu0 %v769
      %v794 = vpop.f32.mrf.mxu0
      %v795 = vadd.f32 %v747, %v794
      %v796 = vpop.f32.mrf.mxu0
      %v797 = vadd.f32 %v749, %v796
      %798 = vdwg.mxu0
      %799 = vmatpush.bf16.msra.mxu0 %v698
      %800 = vmatpush.bf16.msra.mxu0 %v695
      %801 = vmatpush.bf16.msra.mxu0 %v692
      %802 = vmatpush.bf16.msra.mxu0 %v689
      %803 = vmatpush.bf16.msra.mxu0 %v686
      %804 = vmatpush.bf16.msra.mxu0 %v683
      %805 = vmatpush.bf16.msra.mxu0 %v680
      %806 = vmatpush.bf16.msra.mxu0 %v677
      %807 = vmatmul.bf16.gmra.mxu0 %v769
      %v808 = vpop.f32.mrf.mxu0
      %v809 = vadd.f32 %v761, %v808
      %v810 = vpop.f32.mrf.mxu0
      %v811 = vadd.f32 %v763, %v810
      %812 = vdwg.mxu0
      %v813 = vunpack.c.l.bf16 %v587
      %v814 = vunpack.c.l.bf16 %v588
      %v815 = vsub.f32 %v585, %v813
      %v816 = vsub.f32 %v586, %v814
      %v817 = vpack.c.bf16 %v816, %v815
      %818 = vmatpush.bf16.msra.mxu0 %v696
      %819 = vmatpush.bf16.msra.mxu0 %v693
      %820 = vmatpush.bf16.msra.mxu0 %v690
      %821 = vmatpush.bf16.msra.mxu0 %v687
      %822 = vmatpush.bf16.msra.mxu0 %v684
      %823 = vmatpush.bf16.msra.mxu0 %v681
      %824 = vmatpush.bf16.msra.mxu0 %v678
      %825 = vmatpush.bf16.msra.mxu0 %v675
      %826 = vmatmul.bf16.gmra.mxu0 %v817
      %v827 = vpop.f32.mrf.mxu0
      %v828 = vadd.f32 0.0, %v827
      %v829 = vpop.f32.mrf.mxu0
      %v830 = vadd.f32 0.0, %v829
      %831 = vdwg.mxu0
      %832 = vmatpush.bf16.msra.mxu0 %v697
      %833 = vmatpush.bf16.msra.mxu0 %v694
      %834 = vmatpush.bf16.msra.mxu0 %v691
      %835 = vmatpush.bf16.msra.mxu0 %v688
      %836 = vmatpush.bf16.msra.mxu0 %v685
      %837 = vmatpush.bf16.msra.mxu0 %v682
      %838 = vmatpush.bf16.msra.mxu0 %v679
      %839 = vmatpush.bf16.msra.mxu0 %v676
      %840 = vmatmul.bf16.gmra.mxu0 %v817
      %v841 = vpop.f32.mrf.mxu0
      %v842 = vadd.f32 0.0, %v841
      %v843 = vpop.f32.mrf.mxu0
      %v844 = vadd.f32 0.0, %v843
      %845 = vdwg.mxu0
      %846 = vmatpush.bf16.msra.mxu0 %v698
      %847 = vmatpush.bf16.msra.mxu0 %v695
      %848 = vmatpush.bf16.msra.mxu0 %v692
      %849 = vmatpush.bf16.msra.mxu0 %v689
      %850 = vmatpush.bf16.msra.mxu0 %v686
      %851 = vmatpush.bf16.msra.mxu0 %v683
      %852 = vmatpush.bf16.msra.mxu0 %v680
      %853 = vmatpush.bf16.msra.mxu0 %v677
      %854 = vmatmul.bf16.gmra.mxu0 %v817
      %v855 = vpop.f32.mrf.mxu0
      %v856 = vadd.f32 0.0, %v855
      %v857 = vpop.f32.mrf.mxu0
      %v858 = vadd.f32 0.0, %v857
      %859 = vdwg.mxu0
      %v860 = vadd.f32 %v781, %v828
      %v861 = vadd.f32 %v795, %v842
      %v862 = vadd.f32 %v809, %v856
      %v863 = vadd.f32 %v783, %v830
      %v864 = vadd.f32 %v797, %v844
      %v865 = vadd.f32 %v811, %v858
      %v866 = vmul.f32 %v860, %v335
      %v867 = vmul.f32 %v861, %v336
      %v868 = vmul.f32 %v862, %v337
      %v869 = vmul.f32 %v863, %v338
      %v870 = vmul.f32 %v864, %v339
      %v871 = vmul.f32 %v865, %v340
      %v872 = vld [vmem:[%s3] sm:$0xf]
      %v873 = vld [vmem:[%s3 + $0x4] sm:$0xf]
      %v874 = vld [vmem:[%s3 + $0x8] sm:$0xf]
      %v875 = vld [vmem:[%s3 + $0xc] sm:$0xf]
      %v876 = vld [vmem:[%s3 + $0x10] sm:$0xf]
      %v877 = vld [vmem:[%s3 + $0x14] sm:$0xf]
      %v878 = vld [vmem:[%s3 + $0x18] sm:$0xf]
      %v879 = vld [vmem:[%s3 + $0x1c] sm:$0xf]
      %v880 = vld [vmem:[%s3 + $0x20] sm:$0xf]
      %v881 = vld [vmem:[%s3 + $0x24] sm:$0xf]
      %v882 = vld [vmem:[%s3 + $0x28] sm:$0xf]
      %v883 = vld [vmem:[%s3 + $0x2c] sm:$0xf]
      %v884 = vld [vmem:[%s3 + $0x30] sm:$0xf]
      %v885 = vld [vmem:[%s3 + $0x34] sm:$0xf]
      %v886 = vld [vmem:[%s3 + $0x38] sm:$0xf]
      %v887 = vld [vmem:[%s3 + $0x3c] sm:$0xf]
      %v888 = vld [vmem:[%s3 + $0x40] sm:$0xf]
      %v889 = vld [vmem:[%s3 + $0x44] sm:$0xf]
      %v890 = vld [vmem:[%s3 + $0x48] sm:$0xf]
      %v891 = vld [vmem:[%s3 + $0x4c] sm:$0xf]
      %v892 = vld [vmem:[%s3 + $0x50] sm:$0xf]
      %v893 = vld [vmem:[%s3 + $0x54] sm:$0xf]
      %v894 = vld [vmem:[%s3 + $0x58] sm:$0xf]
      %v895 = vld [vmem:[%s3 + $0x5c] sm:$0xf]
      %v896 = vld [vmem:[%s3 + $0x60] sm:$0xf]
      %v897 = vld [vmem:[%s3 + $0x64] sm:$0xf]
      %v898 = vld [vmem:[%s3 + $0x68] sm:$0xf]
      %v899 = vld [vmem:[%s3 + $0x6c] sm:$0xf]
      %v900 = vld [vmem:[%s3 + $0x70] sm:$0xf]
      %v901 = vld [vmem:[%s3 + $0x74] sm:$0xf]
      %v902 = vld [vmem:[%s3 + $0x78] sm:$0xf]
      %v903 = vld [vmem:[%s3 + $0x7c] sm:$0xf]
      %v904 = vld [vmem:[%s3 + $0x80] sm:$0xf]
      %v905 = vld [vmem:[%s3 + $0x84] sm:$0xf]
      %v906 = vld [vmem:[%s3 + $0x88] sm:$0xf]
      %v907 = vld [vmem:[%s3 + $0x8c] sm:$0xf]
      %v908 = vld [vmem:[%s3 + $0x90] sm:$0xf]
      %v909 = vld [vmem:[%s3 + $0x94] sm:$0xf]
      %v910 = vld [vmem:[%s3 + $0x98] sm:$0xf]
      %v911 = vld [vmem:[%s3 + $0x9c] sm:$0xf]
      %v912 = vld [vmem:[%s3 + $0xa0] sm:$0xf]
      %v913 = vld [vmem:[%s3 + $0xa4] sm:$0xf]
      %v914 = vld [vmem:[%s3 + $0xa8] sm:$0xf]
      %v915 = vld [vmem:[%s3 + $0xac] sm:$0xf]
      %v916 = vld [vmem:[%s3 + $0xb0] sm:$0xf]
      %v917 = vld [vmem:[%s3 + $0xb4] sm:$0xf]
      %v918 = vld [vmem:[%s3 + $0xb8] sm:$0xf]
      %v919 = vld [vmem:[%s3 + $0xbc] sm:$0xf]
      %v920 = vpack.c.bf16 %v867, %v866
      %v921 = vpack.c.bf16 %v868, %v868
      %v922 = vpack.c.bf16 %v870, %v869
      %v923 = vpack.c.bf16 %v871, %v871
      %v924 = vunpack.c.l.bf16 %v920
      %v925 = vunpack.c.h.bf16 %v920
      %v926 = vunpack.c.l.bf16 %v921
      %v927 = vunpack.c.l.bf16 %v922
      %v928 = vunpack.c.h.bf16 %v922
      %v929 = vunpack.c.l.bf16 %v923
      %v930 = vsub.f32 %v866, %v924
      %v931 = vsub.f32 %v867, %v925
      %v932 = vsub.f32 %v868, %v926
      %v933 = vsub.f32 %v869, %v927
      %v934 = vsub.f32 %v870, %v928
      %v935 = vsub.f32 %v871, %v929
      %v936 = vpack.c.bf16 %v931, %v930
      %v937 = vpack.c.bf16 %v932, %v932
      %v938 = vpack.c.bf16 %v934, %v933
      %v939 = vpack.c.bf16 %v935, %v935
      %v944 = vunpack.c.l.b16 %v936
      %v945 = vunpack.c.h.b16 %v936
      %v946 = vunpack.c.l.b16 %v937
      %v947 = vunpack.c.l.b16 %v938
      %v948 = vunpack.c.h.b16 %v938
      %v949 = vunpack.c.l.b16 %v939
      %v950 = vpack.c.b16 %v947, %v944
      %v951 = vpack.c.b16 %v948, %v945
      %v952 = vpack.c.b16 %v949, %v946
      %v1004 = vunpack.c.l.b16 %v872
      %v1005 = vunpack.c.l.b16 %v873
      %v1006 = vunpack.c.l.b16 %v874
      %v1007 = vunpack.c.l.b16 %v875
      %v1008 = vunpack.c.l.b16 %v876
      %v1009 = vunpack.c.l.b16 %v877
      %v1010 = vunpack.c.l.b16 %v878
      %v1011 = vunpack.c.l.b16 %v879
      %v1012 = vunpack.c.l.b16 %v880
      %v1013 = vunpack.c.l.b16 %v881
      %v1014 = vunpack.c.l.b16 %v882
      %v1015 = vunpack.c.l.b16 %v883
      %v1016 = vunpack.c.l.b16 %v884
      %v1017 = vunpack.c.l.b16 %v885
      %v1018 = vunpack.c.l.b16 %v886
      %v1019 = vunpack.c.l.b16 %v887
      %v1020 = vunpack.c.l.b16 %v888
      %v1021 = vunpack.c.l.b16 %v889
      %v1022 = vunpack.c.l.b16 %v890
      %v1023 = vunpack.c.l.b16 %v891
      %v1024 = vunpack.c.l.b16 %v892
      %v1025 = vunpack.c.l.b16 %v893
      %v1026 = vunpack.c.l.b16 %v894
      %v1027 = vunpack.c.l.b16 %v895
      %v1028 = vunpack.c.l.b16 %v896
      %v1029 = vunpack.c.l.b16 %v897
      %v1030 = vunpack.c.l.b16 %v898
      %v1031 = vunpack.c.l.b16 %v899
      %v1032 = vunpack.c.l.b16 %v900
      %v1033 = vunpack.c.l.b16 %v901
      %v1034 = vunpack.c.l.b16 %v902
      %v1035 = vunpack.c.l.b16 %v903
      %v1036 = vunpack.c.l.b16 %v904
      %v1037 = vunpack.c.l.b16 %v905
      %v1038 = vunpack.c.l.b16 %v906
      %v1039 = vunpack.c.l.b16 %v907
      %v1040 = vunpack.c.l.b16 %v908
      %v1041 = vunpack.c.l.b16 %v909
      %v1042 = vunpack.c.l.b16 %v910
      %v1043 = vunpack.c.l.b16 %v911
      %v1044 = vunpack.c.l.b16 %v912
      %v1045 = vunpack.c.l.b16 %v913
      %v1046 = vunpack.c.l.b16 %v914
      %v1047 = vunpack.c.l.b16 %v915
      %v1048 = vunpack.c.l.b16 %v916
      %v1049 = vunpack.c.l.b16 %v917
      %v1050 = vunpack.c.l.b16 %v918
      %v1051 = vunpack.c.l.b16 %v919
      %v1052 = vpack.c.b16 %v1005, %v1004
      %v1053 = vpack.c.b16 %v1007, %v1006
      %v1054 = vpack.c.b16 %v1009, %v1008
      %v1055 = vpack.c.b16 %v1011, %v1010
      %v1056 = vpack.c.b16 %v1013, %v1012
      %v1057 = vpack.c.b16 %v1015, %v1014
      %v1058 = vpack.c.b16 %v1017, %v1016
      %v1059 = vpack.c.b16 %v1019, %v1018
      %v1060 = vpack.c.b16 %v1021, %v1020
      %v1061 = vpack.c.b16 %v1023, %v1022
      %v1062 = vpack.c.b16 %v1025, %v1024
      %v1063 = vpack.c.b16 %v1027, %v1026
      %v1064 = vpack.c.b16 %v1029, %v1028
      %v1065 = vpack.c.b16 %v1031, %v1030
      %v1066 = vpack.c.b16 %v1033, %v1032
      %v1067 = vpack.c.b16 %v1035, %v1034
      %v1068 = vpack.c.b16 %v1037, %v1036
      %v1069 = vpack.c.b16 %v1039, %v1038
      %v1070 = vpack.c.b16 %v1041, %v1040
      %v1071 = vpack.c.b16 %v1043, %v1042
      %v1072 = vpack.c.b16 %v1045, %v1044
      %v1073 = vpack.c.b16 %v1047, %v1046
      %v1074 = vpack.c.b16 %v1049, %v1048
      %v1075 = vpack.c.b16 %v1051, %v1050
      %1100 = vmatpush.bf16.msra.mxu0 %v1059
      %1101 = vmatpush.bf16.msra.mxu0 %v1058
      %1102 = vmatpush.bf16.msra.mxu0 %v1057
      %1103 = vmatpush.bf16.msra.mxu0 %v1056
      %1104 = vmatpush.bf16.msra.mxu0 %v1055
      %1105 = vmatpush.bf16.msra.mxu0 %v1054
      %1106 = vmatpush.bf16.msra.mxu0 %v1053
      %1107 = vmatpush.bf16.msra.mxu0 %v1052
      %1108 = vmatmul.bf16.gmra.mxu0 %v950
      %v1109 = vpop.f32.mrf.mxu0
      %v1110 = vadd.f32 0.0, %v1109
      %v1111 = vpop.f32.mrf.mxu0
      %v1112 = vadd.f32 0.0, %v1111
      %1113 = vdwg.mxu0
      %1114 = vmatpush.bf16.msra.mxu0 %v1067
      %1115 = vmatpush.bf16.msra.mxu0 %v1066
      %1116 = vmatpush.bf16.msra.mxu0 %v1065
      %1117 = vmatpush.bf16.msra.mxu0 %v1064
      %1118 = vmatpush.bf16.msra.mxu0 %v1063
      %1119 = vmatpush.bf16.msra.mxu0 %v1062
      %1120 = vmatpush.bf16.msra.mxu0 %v1061
      %1121 = vmatpush.bf16.msra.mxu0 %v1060
      %1122 = vmatmul.bf16.gmra.mxu0 %v951
      %v1123 = vpop.f32.mrf.mxu0
      %v1124 = vadd.f32 %v1110, %v1123
      %v1125 = vpop.f32.mrf.mxu0
      %v1126 = vadd.f32 %v1112, %v1125
      %1127 = vdwg.mxu0
      %1128 = vmatpush.bf16.msra.mxu0 %v1075
      %1129 = vmatpush.bf16.msra.mxu0 %v1074
      %1130 = vmatpush.bf16.msra.mxu0 %v1073
      %1131 = vmatpush.bf16.msra.mxu0 %v1072
      %1132 = vmatpush.bf16.msra.mxu0 %v1071
      %1133 = vmatpush.bf16.msra.mxu0 %v1070
      %1134 = vmatpush.bf16.msra.mxu0 %v1069
      %1135 = vmatpush.bf16.msra.mxu0 %v1068
      %1136 = vmatmul.bf16.gmra.mxu0 %v952
      %v1137 = vpop.f32.mrf.mxu0
      %v1138 = vadd.f32 %v1124, %v1137
      %v1139 = vpop.f32.mrf.mxu0
      %v1140 = vadd.f32 %v1126, %v1139
      %1141 = vdwg.mxu0
      %v1146 = vunpack.c.l.b16 %v920
      %v1147 = vunpack.c.h.b16 %v920
      %v1148 = vunpack.c.l.b16 %v921
      %v1149 = vunpack.c.l.b16 %v922
      %v1150 = vunpack.c.h.b16 %v922
      %v1151 = vunpack.c.l.b16 %v923
      %v1152 = vpack.c.b16 %v1149, %v1146
      %v1153 = vpack.c.b16 %v1150, %v1147
      %v1154 = vpack.c.b16 %v1151, %v1148
      %1158 = vmatpush.bf16.msra.mxu0 %v1059
      %1159 = vmatpush.bf16.msra.mxu0 %v1058
      %1160 = vmatpush.bf16.msra.mxu0 %v1057
      %1161 = vmatpush.bf16.msra.mxu0 %v1056
      %1162 = vmatpush.bf16.msra.mxu0 %v1055
      %1163 = vmatpush.bf16.msra.mxu0 %v1054
      %1164 = vmatpush.bf16.msra.mxu0 %v1053
      %1165 = vmatpush.bf16.msra.mxu0 %v1052
      %1166 = vmatmul.bf16.gmra.mxu0 %v1152
      %v1167 = vpop.f32.mrf.mxu0
      %v1168 = vadd.f32 %v1138, %v1167
      %v1169 = vpop.f32.mrf.mxu0
      %v1170 = vadd.f32 %v1140, %v1169
      %1171 = vdwg.mxu0
      %1172 = vmatpush.bf16.msra.mxu0 %v1067
      %1173 = vmatpush.bf16.msra.mxu0 %v1066
      %1174 = vmatpush.bf16.msra.mxu0 %v1065
      %1175 = vmatpush.bf16.msra.mxu0 %v1064
      %1176 = vmatpush.bf16.msra.mxu0 %v1063
      %1177 = vmatpush.bf16.msra.mxu0 %v1062
      %1178 = vmatpush.bf16.msra.mxu0 %v1061
      %1179 = vmatpush.bf16.msra.mxu0 %v1060
      %1180 = vmatmul.bf16.gmra.mxu0 %v1153
      %v1181 = vpop.f32.mrf.mxu0
      %v1182 = vadd.f32 %v1168, %v1181
      %v1183 = vpop.f32.mrf.mxu0
      %v1184 = vadd.f32 %v1170, %v1183
      %1185 = vdwg.mxu0
      %1186 = vmatpush.bf16.msra.mxu0 %v1075
      %1187 = vmatpush.bf16.msra.mxu0 %v1074
      %1188 = vmatpush.bf16.msra.mxu0 %v1073
      %1189 = vmatpush.bf16.msra.mxu0 %v1072
      %1190 = vmatpush.bf16.msra.mxu0 %v1071
      %1191 = vmatpush.bf16.msra.mxu0 %v1070
      %1192 = vmatpush.bf16.msra.mxu0 %v1069
      %1193 = vmatpush.bf16.msra.mxu0 %v1068
      %1194 = vmatmul.bf16.gmra.mxu0 %v1154
      %v1195 = vpop.f32.mrf.mxu0
      %v1196 = vadd.f32 %v1182, %v1195
      %v1197 = vpop.f32.mrf.mxu0
      %v1198 = vadd.f32 %v1184, %v1197
      %1199 = vdwg.mxu0
      %v1200 = vunpack.c.l.bf16 %v936
      %v1201 = vunpack.c.h.bf16 %v936
      %v1202 = vunpack.c.l.bf16 %v937
      %v1203 = vunpack.c.l.bf16 %v938
      %v1204 = vunpack.c.h.bf16 %v938
      %v1205 = vunpack.c.l.bf16 %v939
      %v1206 = vsub.f32 %v930, %v1200
      %v1207 = vsub.f32 %v931, %v1201
      %v1208 = vsub.f32 %v932, %v1202
      %v1209 = vsub.f32 %v933, %v1203
      %v1210 = vsub.f32 %v934, %v1204
      %v1211 = vsub.f32 %v935, %v1205
      %v1212 = vpack.c.bf16 %v1209, %v1206
      %v1213 = vpack.c.bf16 %v1210, %v1207
      %v1214 = vpack.c.bf16 %v1211, %v1208
      %1215 = vmatpush.bf16.msra.mxu0 %v1059
      %1216 = vmatpush.bf16.msra.mxu0 %v1058
      %1217 = vmatpush.bf16.msra.mxu0 %v1057
      %1218 = vmatpush.bf16.msra.mxu0 %v1056
      %1219 = vmatpush.bf16.msra.mxu0 %v1055
      %1220 = vmatpush.bf16.msra.mxu0 %v1054
      %1221 = vmatpush.bf16.msra.mxu0 %v1053
      %1222 = vmatpush.bf16.msra.mxu0 %v1052
      %1223 = vmatmul.bf16.gmra.mxu0 %v1212
      %v1224 = vpop.f32.mrf.mxu0
      %v1225 = vadd.f32 0.0, %v1224
      %v1226 = vpop.f32.mrf.mxu0
      %v1227 = vadd.f32 0.0, %v1226
      %1228 = vdwg.mxu0
      %1229 = vmatpush.bf16.msra.mxu0 %v1067
      %1230 = vmatpush.bf16.msra.mxu0 %v1066
      %1231 = vmatpush.bf16.msra.mxu0 %v1065
      %1232 = vmatpush.bf16.msra.mxu0 %v1064
      %1233 = vmatpush.bf16.msra.mxu0 %v1063
      %1234 = vmatpush.bf16.msra.mxu0 %v1062
      %1235 = vmatpush.bf16.msra.mxu0 %v1061
      %1236 = vmatpush.bf16.msra.mxu0 %v1060
      %1237 = vmatmul.bf16.gmra.mxu0 %v1213
      %v1238 = vpop.f32.mrf.mxu0
      %v1239 = vadd.f32 %v1225, %v1238
      %v1240 = vpop.f32.mrf.mxu0
      %v1241 = vadd.f32 %v1227, %v1240
      %1242 = vdwg.mxu0
      %1243 = vmatpush.bf16.msra.mxu0 %v1075
      %1244 = vmatpush.bf16.msra.mxu0 %v1074
      %1245 = vmatpush.bf16.msra.mxu0 %v1073
      %1246 = vmatpush.bf16.msra.mxu0 %v1072
      %1247 = vmatpush.bf16.msra.mxu0 %v1071
      %1248 = vmatpush.bf16.msra.mxu0 %v1070
      %1249 = vmatpush.bf16.msra.mxu0 %v1069
      %1250 = vmatpush.bf16.msra.mxu0 %v1068
      %1251 = vmatmul.bf16.gmra.mxu0 %v1214
      %v1252 = vpop.f32.mrf.mxu0
      %v1253 = vadd.f32 %v1239, %v1252
      %v1254 = vpop.f32.mrf.mxu0
      %v1255 = vadd.f32 %v1241, %v1254
      %1256 = vdwg.mxu0
      %v1257 = vadd.f32 %v1196, %v1253
      %v1258 = vadd.f32 %v1198, %v1255
      %vm1259 = vcmask 23552
      %1260 = vst.msk [vmem:[%s328] sm:$0xff] %vm1259, %v1257
      %1261 = vst.msk [vmem:[%s328 + $0x8] sm:$0xff] %vm1259, %v1258
      %s1262 = smul.u32 2, %s19
      %p1263 = scmp.lt.s32.totalorder %s1262, 31
      %s1264 = scalar_select %p1263, %s1262, 31
      %s1265 = smul.addr %s1264, 8
      %s1266 = scalar_lea.vmem %s7, %s1265
      // Predicated region
      $region49: #{_render_color_impl.1} parent=47 // pred_check
        %p1267 = pneg %p199
      $region50: #{_render_color_impl.1} parent=47 // pred_check_branch
        %1269 = sbr.rel (%p1267) target = $region52
      $region51: #{_render_color_impl.1} parent=47 // pred_region
        %s1270 = smul.u32 2, %s19
      $region52: #{_render_color_impl.1} parent=47 // pred_fallthru
        _
    $region48: #{_render_color_impl.1} parent=5 // pred_fallthru
      _
    %p1271 = scmp.le.s32.totalorder 2, %s14
    // Predicated region
    $region53: #{_render_color_impl.1} parent=5 // pred_check
      %p1272 = pneg %p1271
    $region54: #{_render_color_impl.1} parent=5 // pred_check_branch
      %1274 = sbr.rel (%p1272) target = $region56
    $region55: #{_render_color_impl.1} parent=5 // pred_region
      %s1275 = ssub.s32 %s14, 2
      // Predicated region
      $region57: #{_render_color_impl.1} parent=55 // pred_check
        %p1276 = pneg %p205
      $region58: #{_render_color_impl.1} parent=55 // pred_check_branch
        %1278 = sbr.rel (%p1276) target = $region60
      $region59: #{_render_color_impl.1} parent=55 // pred_region
        %s1279 = smul.u32 2, %s20
        %p1280 = scmp.lt.s32.totalorder %s1279, 31
        %s1281 = scalar_select %p1280, %s1279, 31
        %s1282 = smul.addr %s1281, 8
        %s1283 = scalar_lea.vmem %s7, %s1282
      $region60: #{_render_color_impl.1} parent=55 // pred_fallthru
        _
    $region56: #{_render_color_impl.1} parent=5 // pred_fallthru
      _
  $region6: #{_render_color_impl.1} parent=0 // loop_footer
    %s18 = sadd.s32 1, %s14
  $region7: #{_render_color_impl.1} parent=0 // loop_footer_branch
    %13 = sbr.rel target = $region3
  $region8: #{_render_color_impl.1} parent=0 // loop_exit
    _

</llo_original>
